<compile_context>
chip_gen: v7x
topology: tpu7x:2x2x1
jax: 0.10.0
libtpu: 0.0.40
codegen_flags: <defaults>
</compile_context>

<pallas_src>
import functools

import jax
import jax.numpy as jnp
from jax.experimental import pallas as pl
from jax.experimental.pallas import tpu as pltpu


def _round_up(x, m):
    return (x + m - 1) // m * m


def _pad_to(x, rows=None, cols=None):
    r = rows if rows is not None else x.shape[0]
    c = cols if cols is not None else x.shape[1]
    if (r, c) == x.shape:
        return x
    return jnp.pad(x, ((0, r - x.shape[0]), (0, c - x.shape[1])))


def _device_params():
    """Per-generation row tile target, K tile target, and VMEM limit."""
    kind = ""
    try:
        kind = jax.devices()[0].device_kind.lower()
    except Exception:
        pass
    if "v7" in kind:
        # 64 MiB VMEM per TensorCore: leave headroom for double-buffered blocks.
        return dict(tm=256, tk=1024, vmem_limit=56 * 1024 * 1024)
    # v5e / v6e have 128 MiB physical VMEM: bigger tiles amortize step overhead.
    return dict(tm=512, tk=2048, vmem_limit=100 * 1024 * 1024)


def _pick_tiles(n, tm_target, tk_target):
    """Row tile tm (multiple of 128), padded size np_pad (multiple of tm), and a
    reduction tile tk that is a multiple of tm and divides np_pad exactly."""
    tm = min(tm_target, _round_up(n, 128))
    np_pad = _round_up(n, tm)
    mult = np_pad // tm
    best_f = 1
    for f in range(1, mult + 1):
        if mult % f == 0 and f * tm <= tk_target:
            best_f = f
    return np_pad, tm, best_f * tm


def _pick_ktile(kp, tk_target):
    """Largest multiple of 128 that divides kp (kp % 128 == 0) and <= tk_target."""
    m = kp // 128
    best = 128
    for f in range(1, m + 1):
        if m % f == 0 and f * 128 <= tk_target:
            best = f * 128
    return best


# ---------------------------------------------------------------------------
# Kernels (grid = (row tiles, K tiles); reduction axis last, f32 accumulator)
# ---------------------------------------------------------------------------

def _mm_kernel(a_ref, w_ref, o_ref, acc_ref, *, apply_relu):
    kk = pl.program_id(1)

    @pl.when(kk == 0)
    def _():
        acc_ref[...] = jnp.zeros_like(acc_ref)

    acc_ref[...] += jnp.dot(a_ref[...], w_ref[...],
                            preferred_element_type=jnp.float32)

    @pl.when(kk == pl.num_programs(1) - 1)
    def _():
        r = acc_ref[...]
        if apply_relu:
            r = jnp.maximum(r, 0.0)
        o_ref[...] = r.astype(o_ref.dtype)


def _mm_bias_kernel(a_ref, w_ref, b_ref, o_ref, acc_ref, *, apply_relu):
    kk = pl.program_id(1)

    @pl.when(kk == 0)
    def _():
        acc_ref[...] = jnp.zeros_like(acc_ref)

    acc_ref[...] += jnp.dot(a_ref[...], w_ref[...],
                            preferred_element_type=jnp.float32)

    @pl.when(kk == pl.num_programs(1) - 1)
    def _():
        r = acc_ref[...] + b_ref[...]
        if apply_relu:
            r = jnp.maximum(r, 0.0)
        o_ref[...] = r.astype(o_ref.dtype)


def _fused_layer_kernel(adj_ref, y1_ref, b1_ref, w2_ref, o_ref, acc_ref):
    # acc = adj_tile @ y1 (K-tiled); at the last K step: relu(acc + b1) @ w2.
    kk = pl.program_id(1)

    @pl.when(kk == 0)
    def _():
        acc_ref[...] = jnp.zeros_like(acc_ref)

    acc_ref[...] += jnp.dot(adj_ref[...], y1_ref[...],
                            preferred_element_type=jnp.float32)

    @pl.when(kk == pl.num_programs(1) - 1)
    def _():
        h = jnp.maximum(acc_ref[...] + b1_ref[...], 0.0)
        o_ref[...] = jnp.dot(h.astype(w2_ref.dtype), w2_ref[...],
                             preferred_element_type=jnp.float32).astype(o_ref.dtype)


# ---------------------------------------------------------------------------
# pallas_call wrappers (inputs must already be padded to tile multiples)
# ---------------------------------------------------------------------------

def _matmul_k_tiled(a, w, bias=None, *, apply_relu=False,
                    out_dtype=jnp.float32, tm, tk, vmem_limit):
    """maybe_relu(a @ w [+ bias]);  a: (M, K), M % tm == 0, K % tk == 0;
    w: (K, Cp), Cp % 128 == 0;  bias: (1, Cp) f32 or None."""
    m, k = a.shape
    cp = w.shape[1]
    grid = (m // tm, k // tk)
    esz_a = jnp.dtype(a.dtype).itemsize
    esz_w = jnp.dtype(w.dtype).itemsize
    flops = 2 * m * k * cp
    bytes_accessed = esz_a * m * k + esz_w * k * cp + 4 * m * cp

    if bias is not None:
        kernel = functools.partial(_mm_bias_kernel, apply_relu=apply_relu)
        operands = (a, w, bias)
        in_specs = [
            pl.BlockSpec((tm, tk), lambda i, kk: (i, kk)),
            pl.BlockSpec((tk, cp), lambda i, kk: (kk, 0)),
            pl.BlockSpec((1, cp), lambda i, kk: (0, 0)),
        ]
    else:
        kernel = functools.partial(_mm_kernel, apply_relu=apply_relu)
        operands = (a, w)
        in_specs = [
            pl.BlockSpec((tm, tk), lambda i, kk: (i, kk)),
            pl.BlockSpec((tk, cp), lambda i, kk: (kk, 0)),
        ]

    return pl.pallas_call(
        kernel,
        out_shape=jax.ShapeDtypeStruct((m, cp), out_dtype),
        grid=grid,
        in_specs=in_specs,
        out_specs=pl.BlockSpec((tm, cp), lambda i, kk: (i, 0)),
        scratch_shapes=[pltpu.VMEM((tm, cp), jnp.float32)],
        compiler_params=pltpu.CompilerParams(
            dimension_semantics=("parallel", "arbitrary"),
            vmem_limit_bytes=vmem_limit),
        cost_estimate=pl.CostEstimate(flops=flops, transcendentals=0,
                                      bytes_accessed=bytes_accessed),
    )(*operands)


def _fused_gcn_layer(adj, y1, b1, w2, *, out_dtype, tm, tk, vmem_limit):
    """relu(adj @ y1 + b1) @ w2, K-tiled over adj columns, row-parallel."""
    m, k = adj.shape
    hp = y1.shape[1]
    dp = w2.shape[1]
    grid = (m // tm, k // tk)
    esz = jnp.dtype(adj.dtype).itemsize
    flops = 2 * m * k * hp + 2 * m * hp * dp
    bytes_accessed = esz * (m * k + k * hp + hp * dp) + 4 * hp + \
        jnp.dtype(out_dtype).itemsize * m * dp

    return pl.pallas_call(
        _fused_layer_kernel,
        out_shape=jax.ShapeDtypeStruct((m, dp), out_dtype),
        grid=grid,
        in_specs=[
            pl.BlockSpec((tm, tk), lambda i, kk: (i, kk)),
            pl.BlockSpec((tk, hp), lambda i, kk: (kk, 0)),
            pl.BlockSpec((1, hp), lambda i, kk: (0, 0)),
            pl.BlockSpec((hp, dp), lambda i, kk: (0, 0)),
        ],
        out_specs=pl.BlockSpec((tm, dp), lambda i, kk: (i, 0)),
        scratch_shapes=[pltpu.VMEM((tm, hp), jnp.float32)],
        compiler_params=pltpu.CompilerParams(
            dimension_semantics=("parallel", "arbitrary"),
            vmem_limit_bytes=vmem_limit),
        cost_estimate=pl.CostEstimate(flops=flops, transcendentals=0,
                                      bytes_accessed=bytes_accessed),
    )(adj, y1, b1, w2)


# ---------------------------------------------------------------------------
# Forward pass
# ---------------------------------------------------------------------------

def gan_label_propagation_forward(adj, features, params, *,
                                  compute_dtype=jnp.bfloat16):
    """Pallas forward pass of GANLabelPropagation.

    adj:      (N, N)    float32 adjacency matrix
    features: (N, D_in) float32 node features, or None for identity features
              (the label_propagation default, torch.eye(N)) -> skips F @ W1.
    params:   dict with w1 (D_in, H), b1 (H,), w2 (H, D_out), b2 (D_out,)
              (weights stored pre-transposed to (in, out) convention)
    compute_dtype: matmul streaming dtype (bf16 default; f32 accumulation).
    returns:  (N, D_out) float32 logits
    """
    n = adj.shape[0]
    dev = _device_params()
    np_pad, tm, tk = _pick_tiles(n, dev["tm"], dev["tk"])
    vmem_limit = dev["vmem_limit"]

    w1, b1, w2, b2 = params["w1"], params["b1"], params["w2"], params["b2"]
    d_in, h = w1.shape
    d_out = w2.shape[1]
    hp = _round_up(h, 128)
    dp = _round_up(d_out, 128)

    # Zero-pad channel dims to lane-dense widths. Exact: padded W1 cols / b1
    # entries are 0 -> relu(0) = 0 -> padded x cols are 0 -> padded W2 rows
    # contribute nothing; padded adj rows/cols are 0 and sliced off at the end.
    b1p = _pad_to(b1.reshape(1, h), cols=hp).astype(jnp.float32)
    b2p = _pad_to(b2.reshape(1, d_out), cols=dp).astype(jnp.float32)
    w2p = _pad_to(w2, rows=hp, cols=dp).astype(compute_dtype)

    # Pad adj ONCE (square, to np_pad) and stream it in compute_dtype; it is
    # read twice and dominates HBM traffic.
    adj_p = jnp.pad(adj, ((0, np_pad - n), (0, np_pad - n))).astype(compute_dtype)

    # Reassociated layer 1: y1 = features @ W1 (identity features -> W1 itself).
    if features is None:
        assert d_in == n, "identity features require input_dim == num_nodes"
        y1 = _pad_to(w1, rows=np_pad, cols=hp).astype(compute_dtype)
    else:
        kpf = _round_up(d_in, 128)
        tkf = _pick_ktile(kpf, dev["tk"])
        f_p = _pad_to(features, rows=np_pad, cols=kpf).astype(compute_dtype)
        w1p = _pad_to(w1, rows=kpf, cols=hp).astype(compute_dtype)
        y1 = _matmul_k_tiled(f_p, w1p, bias=None, apply_relu=False,
                             out_dtype=compute_dtype, tm=tm, tk=tkf,
                             vmem_limit=vmem_limit)

    # Layer-1 propagation + ReLU fused with layer-2 pre-multiply:
    #   y2 = relu(adj @ y1 + b1) @ W2           (K-tiled over adj columns)
    y2 = _fused_gcn_layer(adj_p, y1, b1p, w2p, out_dtype=compute_dtype,
                          tm=tm, tk=tk, vmem_limit=vmem_limit)

    # Layer-2 propagation + bias: out = adj @ y2 + b2
    outp = _matmul_k_tiled(adj_p, y2, bias=b2p, apply_relu=False,
                           out_dtype=jnp.float32, tm=tm, tk=tk,
                           vmem_limit=vmem_limit)
    return outp[:n, :d_out]


def init_params(key, input_dim, hidden_dim, output_dim):
    """nn.Linear-style init (uniform +/- 1/sqrt(fan_in)); weights stored (in, out)."""
    k1, k2, k3, k4 = jax.random.split(key, 4)
    lim1 = 1.0 / jnp.sqrt(jnp.float32(input_dim))
    lim2 = 1.0 / jnp.sqrt(jnp.float32(hidden_dim))
    return {
        "w1": jax.random.uniform(k1, (input_dim, hidden_dim), jnp.float32,
                                 -lim1, lim1),
        "b1": jax.random.uniform(k2, (hidden_dim,), jnp.float32, -lim1, lim1),
        "w2": jax.random.uniform(k3, (hidden_dim, output_dim), jnp.float32,
                                 -lim2, lim2),
        "b2": jax.random.uniform(k4, (output_dim,), jnp.float32, -lim2, lim2),
    }


def reference_forward(adj, features, params):
    # Pure-JAX reference in the original PyTorch association order.
    x = jnp.maximum(jnp.dot(jnp.dot(adj, features), params["w1"])
                    + params["b1"], 0.0)
    return jnp.dot(jnp.dot(adj, x), params["w2"]) + params["b2"]


if __name__ == "__main__":
    key = jax.random.PRNGKey(0)
    k_adj, k_param, k_adj2, k_feat2, k_param2 = jax.random.split(key, 5)

    hidden_dim, output_dim = 32, 4

    # Case 1: label-propagation setting, features = I_N (fast path, features=None).
    N = 8
    a = jax.random.uniform(k_adj, (N, N), jnp.float32)
    adj = (a + a.T) * 0.5 + jnp.eye(N, dtype=jnp.float32)
    params = init_params(k_param, N, hidden_dim, output_dim)
    ref_id = reference_forward(adj, jnp.eye(N, dtype=jnp.float32), params)

    out_f32 = jax.block_until_ready(
        gan_label_propagation_forward(adj, None, params,
                                      compute_dtype=jnp.float32))
    assert out_f32.shape == (N, output_dim)
    assert jnp.allclose(out_f32, ref_id, atol=2e-3, rtol=2e-3), \
        "identity-features f32 path mismatch vs reference"

    out_bf16 = jax.block_until_ready(
        gan_label_propagation_forward(adj, None, params))
    assert out_bf16.shape == (N, output_dim)
    assert jnp.allclose(out_bf16, ref_id, atol=5e-2, rtol=5e-2), \
        "identity-features bf16 path mismatch vs reference"

    # Case 2: general (non-identity) features.
    N2, D_in2 = 16, 24
    a2 = jax.random.uniform(k_adj2, (N2, N2), jnp.float32)
    adj2 = (a2 + a2.T) * 0.5 + jnp.eye(N2, dtype=jnp.float32)
    feats2 = jax.random.normal(k_feat2, (N2, D_in2), jnp.float32)
    params2 = init_params(k_param2, D_in2, hidden_dim, output_dim)
    ref2 = reference_forward(adj2, feats2, params2)

    out2_f32 = jax.block_until_ready(
        gan_label_propagation_forward(adj2, feats2, params2,
                                      compute_dtype=jnp.float32))
    assert out2_f32.shape == (N2, output_dim)
    assert jnp.allclose(out2_f32, ref2, atol=2e-3, rtol=2e-3), \
        "general-features f32 path mismatch vs reference"

    out2_bf16 = jax.block_until_ready(
        gan_label_propagation_forward(adj2, feats2, params2))
    assert jnp.allclose(out2_bf16, ref2, atol=5e-2, rtol=5e-2), \
        "general-features bf16 path mismatch vs reference"

    print("KERNEL_OK")
</pallas_src>

<mosaic_0001>
module attributes {stable_mosaic.version = 11 : i64} {
  func.func @_fused_layer_kernel(%arg0: i32, %arg1: i32, %arg2: memref<128x128xf32, #tpu.memory_space<vmem>>, %arg3: memref<128x128xf32, #tpu.memory_space<vmem>>, %arg4: memref<1x128xf32, #tpu.memory_space<vmem>>, %arg5: memref<128x128xf32, #tpu.memory_space<vmem>>, %arg6: memref<128x128xf32, #tpu.memory_space<vmem>>, %arg7: memref<128x128xf32, #tpu.memory_space<vmem>>) attributes {dimension_semantics = [#tpu.dimension_semantics<parallel>, #tpu.dimension_semantics<arbitrary>], iteration_bounds = array<i64: 1, 1>, scalar_prefetch = 0 : i64, scratch_operands = 1 : i64, tpu.core_type = #tpu.core_type<tc>, window_params = [{transform_indices = @transform_0, window_bounds = array<i64: 128, 128>}, {transform_indices = @transform_1, window_bounds = array<i64: 128, 128>}, {pipeline_mode = #tpu.pipeline_mode<synchronous>, transform_indices = @transform_2, window_bounds = array<i64: 1, 128>}, {pipeline_mode = #tpu.pipeline_mode<synchronous>, transform_indices = @transform_3, window_bounds = array<i64: 128, 128>}, {transform_indices = @transform_4, window_bounds = array<i64: 128, 128>}]} {
    %c0_i32 = arith.constant 0 : i32
    %0 = arith.cmpi eq, %arg1, %c0_i32 : i32
    %1 = arith.extui %0 : i1 to i32
    %c0_i32_0 = arith.constant 0 : i32
    %2 = arith.cmpi ne, %1, %c0_i32_0 : i32
    scf.if %2 {
      %cst_10 = arith.constant 0.000000e+00 : f32
      %12 = vector.broadcast %cst_10 : f32 to vector<128x128xf32>
      %c0_11 = arith.constant 0 : index
      %c0_12 = arith.constant 0 : index
      %13 = vector.load %arg7[%c0_11, %c0_12] : memref<128x128xf32, #tpu.memory_space<vmem>>, vector<128x128xf32>
      tpu.vector_store %arg7[%c0_11, %c0_12], %12 {strides = array<i32>} : memref<128x128xf32, #tpu.memory_space<vmem>>, vector<128x128xf32>,
    } else {
    }
    %c0 = arith.constant 0 : index
    %c0_1 = arith.constant 0 : index
    %3 = vector.load %arg7[%c0, %c0_1] : memref<128x128xf32, #tpu.memory_space<vmem>>, vector<128x128xf32>
    %c0_2 = arith.constant 0 : index
    %c0_3 = arith.constant 0 : index
    %4 = vector.load %arg2[%c0_2, %c0_3] : memref<128x128xf32, #tpu.memory_space<vmem>>, vector<128x128xf32>
    %c0_4 = arith.constant 0 : index
    %c0_5 = arith.constant 0 : index
    %5 = vector.load %arg3[%c0_4, %c0_5] : memref<128x128xf32, #tpu.memory_space<vmem>>, vector<128x128xf32>
    %cst = arith.constant dense<0.000000e+00> : vector<128x128xf32>
    %6 = tpu.matmul %4, %5, %cst {dimension_numbers = #tpu.dot_dimension_numbers<[1], [0], [0], [1], [0, 0, 1, 1], [], []>} : vector<128x128xf32>, vector<128x128xf32>, vector<128x128xf32> -> vector<128x128xf32>
    %7 = arith.addf %3, %6 : vector<128x128xf32>
    %c0_6 = arith.constant 0 : index
    %c0_7 = arith.constant 0 : index
    %8 = vector.load %arg7[%c0_6, %c0_7] : memref<128x128xf32, #tpu.memory_space<vmem>>, vector<128x128xf32>
    tpu.vector_store %arg7[%c0_6, %c0_7], %7 {strides = array<i32>} : memref<128x128xf32, #tpu.memory_space<vmem>>, vector<128x128xf32>,
    %c0_i32_8 = arith.constant 0 : i32
    %9 = arith.cmpi eq, %arg1, %c0_i32_8 : i32
    %10 = arith.extui %9 : i1 to i32
    %c0_i32_9 = arith.constant 0 : i32
    %11 = arith.cmpi ne, %10, %c0_i32_9 : i32
    scf.if %11 {
      %c0_10 = arith.constant 0 : index
      %c0_11 = arith.constant 0 : index
      %12 = vector.load %arg7[%c0_10, %c0_11] : memref<128x128xf32, #tpu.memory_space<vmem>>, vector<128x128xf32>
      %c0_12 = arith.constant 0 : index
      %c0_13 = arith.constant 0 : index
      %13 = vector.load %arg4[%c0_12, %c0_13] : memref<1x128xf32, #tpu.memory_space<vmem>>, vector<1x128xf32>
      %14 = vector.broadcast %13 : vector<1x128xf32> to vector<128x128xf32>
      %15 = arith.addf %12, %14 : vector<128x128xf32>
      %cst_14 = arith.constant 0.000000e+00 : f32
      %16 = vector.broadcast %cst_14 : f32 to vector<128x128xf32>
      %17 = arith.maximumf %15, %16 : vector<128x128xf32>
      %c0_15 = arith.constant 0 : index
      %c0_16 = arith.constant 0 : index
      %18 = vector.load %arg5[%c0_15, %c0_16] : memref<128x128xf32, #tpu.memory_space<vmem>>, vector<128x128xf32>
      %cst_17 = arith.constant dense<0.000000e+00> : vector<128x128xf32>
      %19 = tpu.matmul %17, %18, %cst_17 {dimension_numbers = #tpu.dot_dimension_numbers<[1], [0], [0], [1], [0, 0, 1, 1], [], []>} : vector<128x128xf32>, vector<128x128xf32>, vector<128x128xf32> -> vector<128x128xf32>
      %c0_18 = arith.constant 0 : index
      %c0_19 = arith.constant 0 : index
      %20 = vector.load %arg6[%c0_18, %c0_19] : memref<128x128xf32, #tpu.memory_space<vmem>>, vector<128x128xf32>
      tpu.vector_store %arg6[%c0_18, %c0_19], %19 {strides = array<i32>} : memref<128x128xf32, #tpu.memory_space<vmem>>, vector<128x128xf32>,
    } else {
    }
    return
  }
  func.func @transform_0(%arg0: i32, %arg1: i32) -> (i32, i32) {
    %c0_i32 = arith.constant 0 : i32
    return %arg0, %arg1 : i32, i32
  }
  func.func @transform_1(%arg0: i32, %arg1: i32) -> (i32, i32) {
    %c0_i32 = arith.constant 0 : i32
    %c0_i32_0 = arith.constant 0 : i32
    return %arg1, %c0_i32 : i32, i32
  }
  func.func @transform_2(%arg0: i32, %arg1: i32) -> (i32, i32) {
    %c0_i32 = arith.constant 0 : i32
    %c0_i32_0 = arith.constant 0 : i32
    %c0_i32_1 = arith.constant 0 : i32
    return %c0_i32, %c0_i32_0 : i32, i32
  }
  func.func @transform_3(%arg0: i32, %arg1: i32) -> (i32, i32) {
    %c0_i32 = arith.constant 0 : i32
    %c0_i32_0 = arith.constant 0 : i32
    %c0_i32_1 = arith.constant 0 : i32
    return %c0_i32, %c0_i32_0 : i32, i32
  }
  func.func @transform_4(%arg0: i32, %arg1: i32) -> (i32, i32) {
    %c0_i32 = arith.constant 0 : i32
    %c0_i32_0 = arith.constant 0 : i32
    return %arg0, %c0_i32 : i32, i32
  }
}

</mosaic_0001>

<llo_original>
// kernel: tpu_custom_call.1
$region0: #{tpu_custom_call.1}
  #allocation0 [shape = 'u32[]', space=smem, size = 0x4, offset = 0x4, fixed_abs, tag = 'smem constant byte address 0x4 - core index']
  #allocation1 [shape = 'u32[144,128]{1,0:T(1,128)}', space=vmem, size = 0x12000, scoped, tag = 'internal scratch']
  #allocation2 [shape = 'f32[128,128]{1,0:T(8,128)}', space=vmem, size = 0x10000, scoped, tag = 'scratch operand']
  %s0 = inlined_call_operand.hbm [shape: f32[128,128], index: 0, kind: input, shape index: {}]
  %s1 = inlined_call_operand.hbm [shape: f32[128,128], index: 1, kind: input, shape index: {}]
  %s2 = inlined_call_operand.hbm [shape: f32[1,128], index: 2, kind: input, shape index: {}]
  %s3 = inlined_call_operand.hbm [shape: f32[128,128], index: 3, kind: input, shape index: {}]
  %s4 = inlined_call_operand.hbm [shape: f32[128,128], index: 4, kind: output, shape index: {}]
  %s5 = sld [smem:[#allocation0]]
  $region50: #{tpu_custom_call.1} parent=0
    _
  %s7 = ssub.s32 1, %s5
  %s8 = scalar_select 0, %s7, %s5
  $region1: #{tpu_custom_call.1} parent=0
    #allocation3 [shape = 'u8[65536]{0}', space=vmem, size = 0x10000, scoped, tag = 'input window, operand 0, single buffered']
    #allocation4 [shape = 's32[1]{0}', space=sflag, size = 0x4, scoped, tag = 'scoped memory for tpu_custom_call.1']
    #allocation5 [shape = 's32[1]{0}', space=sflag, size = 0x4, scoped, tag = 'scoped memory for tpu_custom_call.1']
    #allocation6 [shape = 'u8[65536]{0}', space=vmem, size = 0x10000, scoped, tag = 'input window, operand 1, single buffered']
    #allocation7 [shape = 's32[1]{0}', space=sflag, size = 0x4, scoped, tag = 'scoped memory for tpu_custom_call.1']
    #allocation8 [shape = 'u8[512]{0}', space=vmem, size = 0x400, scoped, tag = 'input window, operand 2, single buffered']
    #allocation9 [shape = 'u8[65536]{0}', space=vmem, size = 0x10000, scoped, tag = 'input window, operand 3, single buffered']
    #allocation10 [shape = 's32[1]{0}', space=sflag, size = 0x4, scoped, tag = 'scoped memory for tpu_custom_call.1']
    #allocation11 [shape = 'u8[65536]{0}', space=vmem, size = 0x10000, scoped, tag = 'output window, operand 0, single buffered']
    %9 = vsyncpa [#allocation4], 0
    %10 = vsyncpa [#allocation7], 0
    %11 = vsyncpa [#allocation10], 0
    %12 = vsyncpa [#allocation5], 0
    // Predicated region
    $region2: #{tpu_custom_call.1} parent=1 // pred_check
      _
    $region3: #{tpu_custom_call.1} parent=1 // pred_check_branch
      %14 = sbr.rel (0) target = $region5
    $region4: #{tpu_custom_call.1} parent=1 // pred_region
      %s16 = ssub.s32 2048, 2048
      %17 = vsyncadd [#allocation4], %s16
      %s18 = sshll.u32 [#allocation3], 4
      %s19 = int_to_ptr.vmem [resolvable:$true] %s18
      %24 = dma.hbm_to_vmem [thread:$0]  %s0, 2048, %s19, [#allocation4], 128, 128, 8
    $region5: #{tpu_custom_call.1} parent=1 // pred_fallthru
      _
    // Predicated region
    $region6: #{tpu_custom_call.1} parent=1 // pred_check
      _
    $region7: #{tpu_custom_call.1} parent=1 // pred_check_branch
      %26 = sbr.rel (0) target = $region9
    $region8: #{tpu_custom_call.1} parent=1 // pred_region
      %s28 = ssub.s32 2048, 2048
      %29 = vsyncadd [#allocation7], %s28
      %s30 = sshll.u32 [#allocation6], 4
      %s31 = int_to_ptr.vmem [resolvable:$true] %s30
      %36 = dma.hbm_to_vmem [thread:$0]  %s1, 2048, %s31, [#allocation7], 128, 128, 8
    $region9: #{tpu_custom_call.1} parent=1 // pred_fallthru
      _
    // Predicated region
    $region10: #{tpu_custom_call.1} parent=1 // pred_check
      _
    $region11: #{tpu_custom_call.1} parent=1 // pred_check_branch
      %38 = sbr.rel (0) target = $region13
    $region12: #{tpu_custom_call.1} parent=1 // pred_region
      %s40 = ssub.s32 16, 16
      %41 = vsyncadd [#allocation7], %s40
      %s43 = sshll.u32 [#allocation8], 4
      %s44 = int_to_ptr.vmem [resolvable:$true] %s43
      %46 = dma.hbm_to_vmem [thread:$0]  %s2, 16, %s44, [#allocation7]
    $region13: #{tpu_custom_call.1} parent=1 // pred_fallthru
      _
    // Predicated region
    $region14: #{tpu_custom_call.1} parent=1 // pred_check
      _
    $region15: #{tpu_custom_call.1} parent=1 // pred_check_branch
      %48 = sbr.rel (0) target = $region17
    $region16: #{tpu_custom_call.1} parent=1 // pred_region
      %s50 = ssub.s32 2048, 2048
      %51 = vsyncadd [#allocation10], %s50
      %s52 = sshll.u32 [#allocation9], 4
      %s53 = int_to_ptr.vmem [resolvable:$true] %s52
      %58 = dma.hbm_to_vmem [thread:$0]  %s3, 2048, %s53, [#allocation10], 128, 128, 8
    $region17: #{tpu_custom_call.1} parent=1 // pred_fallthru
      _
    // Predicated region
    $region18: #{tpu_custom_call.1} parent=1 // pred_check
      _
    $region19: #{tpu_custom_call.1} parent=1 // pred_check_branch
      %60 = sbr.rel (0) target = $region21
    $region20: #{tpu_custom_call.1} parent=1 // pred_region
      %61 = dma.done [#allocation4], 2048
    $region21: #{tpu_custom_call.1} parent=1 // pred_fallthru
      _
    // Predicated region
    $region22: #{tpu_custom_call.1} parent=1 // pred_check
      _
    $region23: #{tpu_custom_call.1} parent=1 // pred_check_branch
      %63 = sbr.rel (0) target = $region25
    $region24: #{tpu_custom_call.1} parent=1 // pred_region
      %64 = dma.done [#allocation7], 2048
    $region25: #{tpu_custom_call.1} parent=1 // pred_fallthru
      _
    // Predicated region
    $region26: #{tpu_custom_call.1} parent=1 // pred_check
      _
    $region27: #{tpu_custom_call.1} parent=1 // pred_check_branch
      %66 = sbr.rel (0) target = $region29
    $region28: #{tpu_custom_call.1} parent=1 // pred_region
      %67 = dma.done [#allocation7], 16
    $region29: #{tpu_custom_call.1} parent=1 // pred_fallthru
      _
    // Predicated region
    $region30: #{tpu_custom_call.1} parent=1 // pred_check
      _
    $region31: #{tpu_custom_call.1} parent=1 // pred_check_branch
      %69 = sbr.rel (0) target = $region33
    $region32: #{tpu_custom_call.1} parent=1 // pred_region
      %70 = dma.done [#allocation10], 2048
    $region33: #{tpu_custom_call.1} parent=1 // pred_fallthru
      _
    %p71 = scmp.eq.s32.totalorder 0, 0
    // Predicated region
    $region34: #{tpu_custom_call.1} parent=1 // pred_check
      %p72 = pneg %p71
    $region35: #{tpu_custom_call.1} parent=1 // pred_check_branch
      %74 = sbr.rel (%p72) target = $region37
    $region36: #{tpu_custom_call.1} parent=1 // pred_region
      %75 = vst [vmem:[#allocation2] sm:$0xff] 0.0
      %76 = vst [vmem:[#allocation2 + $0x8] sm:$0xff] 0.0
      %77 = vst [vmem:[#allocation2 + $0x10] sm:$0xff] 0.0
      %78 = vst [vmem:[#allocation2 + $0x18] sm:$0xff] 0.0
      %79 = vst [vmem:[#allocation2 + $0x20] sm:$0xff] 0.0
      %80 = vst [vmem:[#allocation2 + $0x28] sm:$0xff] 0.0
      %81 = vst [vmem:[#allocation2 + $0x30] sm:$0xff] 0.0
      %82 = vst [vmem:[#allocation2 + $0x38] sm:$0xff] 0.0
      %83 = vst [vmem:[#allocation2 + $0x40] sm:$0xff] 0.0
      %84 = vst [vmem:[#allocation2 + $0x48] sm:$0xff] 0.0
      %85 = vst [vmem:[#allocation2 + $0x50] sm:$0xff] 0.0
      %86 = vst [vmem:[#allocation2 + $0x58] sm:$0xff] 0.0
      %87 = vst [vmem:[#allocation2 + $0x60] sm:$0xff] 0.0
      %88 = vst [vmem:[#allocation2 + $0x68] sm:$0xff] 0.0
      %89 = vst [vmem:[#allocation2 + $0x70] sm:$0xff] 0.0
      %90 = vst [vmem:[#allocation2 + $0x78] sm:$0xff] 0.0
    $region37: #{tpu_custom_call.1} parent=1 // pred_fallthru
      _
    %v91 = vld [vmem:[#allocation2] sm:$0xff]
    %v92 = vld [vmem:[#allocation2 + $0x8] sm:$0xff]
    %v93 = vld [vmem:[#allocation2 + $0x10] sm:$0xff]
    %v94 = vld [vmem:[#allocation2 + $0x18] sm:$0xff]
    %v95 = vld [vmem:[#allocation2 + $0x20] sm:$0xff]
    %v96 = vld [vmem:[#allocation2 + $0x28] sm:$0xff]
    %v97 = vld [vmem:[#allocation2 + $0x30] sm:$0xff]
    %v98 = vld [vmem:[#allocation2 + $0x38] sm:$0xff]
    %v99 = vld [vmem:[#allocation2 + $0x40] sm:$0xff]
    %v100 = vld [vmem:[#allocation2 + $0x48] sm:$0xff]
    %v101 = vld [vmem:[#allocation2 + $0x50] sm:$0xff]
    %v102 = vld [vmem:[#allocation2 + $0x58] sm:$0xff]
    %v103 = vld [vmem:[#allocation2 + $0x60] sm:$0xff]
    %v104 = vld [vmem:[#allocation2 + $0x68] sm:$0xff]
    %v105 = vld [vmem:[#allocation2 + $0x70] sm:$0xff]
    %v106 = vld [vmem:[#allocation2 + $0x78] sm:$0xff]
    %v107 = vld [vmem:[#allocation3] sm:$0xff]
    %v108 = vld [vmem:[#allocation3 + $0x8] sm:$0xff]
    %v109 = vld [vmem:[#allocation3 + $0x10] sm:$0xff]
    %v110 = vld [vmem:[#allocation3 + $0x18] sm:$0xff]
    %v111 = vld [vmem:[#allocation3 + $0x20] sm:$0xff]
    %v112 = vld [vmem:[#allocation3 + $0x28] sm:$0xff]
    %v113 = vld [vmem:[#allocation3 + $0x30] sm:$0xff]
    %v114 = vld [vmem:[#allocation3 + $0x38] sm:$0xff]
    %v115 = vld [vmem:[#allocation3 + $0x40] sm:$0xff]
    %v116 = vld [vmem:[#allocation3 + $0x48] sm:$0xff]
    %v117 = vld [vmem:[#allocation3 + $0x50] sm:$0xff]
    %v118 = vld [vmem:[#allocation3 + $0x58] sm:$0xff]
    %v119 = vld [vmem:[#allocation3 + $0x60] sm:$0xff]
    %v120 = vld [vmem:[#allocation3 + $0x68] sm:$0xff]
    %v121 = vld [vmem:[#allocation3 + $0x70] sm:$0xff]
    %v122 = vld [vmem:[#allocation3 + $0x78] sm:$0xff]
    %v123 = vld [vmem:[#allocation6] sm:$0xff]
    %v124 = vld [vmem:[#allocation6 + $0x8] sm:$0xff]
    %v125 = vld [vmem:[#allocation6 + $0x10] sm:$0xff]
    %v126 = vld [vmem:[#allocation6 + $0x18] sm:$0xff]
    %v127 = vld [vmem:[#allocation6 + $0x20] sm:$0xff]
    %v128 = vld [vmem:[#allocation6 + $0x28] sm:$0xff]
    %v129 = vld [vmem:[#allocation6 + $0x30] sm:$0xff]
    %v130 = vld [vmem:[#allocation6 + $0x38] sm:$0xff]
    %v131 = vld [vmem:[#allocation6 + $0x40] sm:$0xff]
    %v132 = vld [vmem:[#allocation6 + $0x48] sm:$0xff]
    %v133 = vld [vmem:[#allocation6 + $0x50] sm:$0xff]
    %v134 = vld [vmem:[#allocation6 + $0x58] sm:$0xff]
    %v135 = vld [vmem:[#allocation6 + $0x60] sm:$0xff]
    %v136 = vld [vmem:[#allocation6 + $0x68] sm:$0xff]
    %v137 = vld [vmem:[#allocation6 + $0x70] sm:$0xff]
    %v138 = vld [vmem:[#allocation6 + $0x78] sm:$0xff]
    %139 = vmatprep.subr.mxu0 0.0
    %140 = vmatpush1.msra.mxu0 %v123
    %141 = vmatprep.subr.mxu0 0.0
    %142 = vmatpush1.msra.mxu0 %v124
    %143 = vmatprep.subr.mxu0 0.0
    %144 = vmatpush1.msra.mxu0 %v125
    %145 = vmatprep.subr.mxu0 0.0
    %146 = vmatpush1.msra.mxu0 %v126
    %147 = vmatprep.subr.mxu0 0.0
    %148 = vmatpush1.msra.mxu0 %v127
    %149 = vmatprep.subr.mxu0 0.0
    %150 = vmatpush1.msra.mxu0 %v128
    %151 = vmatprep.subr.mxu0 0.0
    %152 = vmatpush1.msra.mxu0 %v129
    %153 = vmatprep.subr.mxu0 0.0
    %154 = vmatpush1.msra.mxu0 %v130
    %155 = vmatprep.subr.mxu0 0.0
    %156 = vmatpush1.msra.mxu0 %v131
    %157 = vmatprep.subr.mxu0 0.0
    %158 = vmatpush1.msra.mxu0 %v132
    %159 = vmatprep.subr.mxu0 0.0
    %160 = vmatpush1.msra.mxu0 %v133
    %161 = vmatprep.subr.mxu0 0.0
    %162 = vmatpush1.msra.mxu0 %v134
    %163 = vmatprep.subr.mxu0 0.0
    %164 = vmatpush1.msra.mxu0 %v135
    %165 = vmatprep.subr.mxu0 0.0
    %166 = vmatpush1.msra.mxu0 %v136
    %167 = vmatprep.subr.mxu0 0.0
    %168 = vmatpush1.msra.mxu0 %v137
    %169 = vmatprep.subr.mxu0 0.0
    %170 = vmatpush1.msra.mxu0 %v138
    %171 = vmatprep.subr.mxu0 0.0
    %172 = vmatpush1.msra.mxu0 0.0
    %173 = vmatprep.subr.mxu0 0.0
    %174 = vmatpush1.msra.mxu0 0.0
    %175 = vmatprep.subr.mxu0 0.0
    %176 = vmatpush1.msra.mxu0 0.0
    %177 = vmatprep.subr.mxu0 0.0
    %178 = vmatpush1.msra.mxu0 0.0
    %179 = vmatprep.subr.mxu0 0.0
    %180 = vmatpush1.msra.mxu0 0.0
    %181 = vmatprep.subr.mxu0 0.0
    %182 = vmatpush1.msra.mxu0 0.0
    %183 = vmatprep.subr.mxu0 0.0
    %184 = vmatpush1.msra.mxu0 0.0
    %185 = vmatprep.subr.mxu0 0.0
    %186 = vmatpush1.msra.mxu0 0.0
    %187 = vmatprep.subr.mxu0 0.0
    %188 = vmatpush1.msra.mxu0 0.0
    %189 = vmatprep.subr.mxu0 0.0
    %190 = vmatpush1.msra.mxu0 0.0
    %191 = vmatprep.subr.mxu0 0.0
    %192 = vmatpush1.msra.mxu0 0.0
    %193 = vmatprep.subr.mxu0 0.0
    %194 = vmatpush1.msra.mxu0 0.0
    %195 = vmatprep.subr.mxu0 0.0
    %196 = vmatpush1.msra.mxu0 0.0
    %197 = vmatprep.subr.mxu0 0.0
    %198 = vmatpush1.msra.mxu0 0.0
    %199 = vmatprep.subr.mxu0 0.0
    %200 = vmatpush1.msra.mxu0 0.0
    %201 = vmatprep.subr.mxu0 0.0
    %202 = vmatpush1.msra.mxu0 0.0
    %203 = vmatprep.mubr.f32.mxu0 0.0
    %204 = vmatmul.mubr.f32.gmra.mrb[0].mxu0 %v107
    %v205 = vpop.f32.mrb[0].mxu0
    %v206 = vadd.f32 0.0, %v205
    %v207 = vpop.f32.mrb[0].mxu0
    %208 = vmatprep.mubr.f32.mxu0 0.0
    %209 = vmatmul.mubr.f32.gmra.mrb[0].mxu0 %v108
    %v210 = vpop.f32.mrb[0].mxu0
    %v211 = vadd.f32 0.0, %v210
    %v212 = vpop.f32.mrb[0].mxu0
    %213 = vmatprep.mubr.f32.mxu0 0.0
    %214 = vmatmul.mubr.f32.gmra.mrb[0].mxu0 %v109
    %v215 = vpop.f32.mrb[0].mxu0
    %v216 = vadd.f32 0.0, %v215
    %v217 = vpop.f32.mrb[0].mxu0
    %218 = vmatprep.mubr.f32.mxu0 0.0
    %219 = vmatmul.mubr.f32.gmra.mrb[0].mxu0 %v110
    %v220 = vpop.f32.mrb[0].mxu0
    %v221 = vadd.f32 0.0, %v220
    %v222 = vpop.f32.mrb[0].mxu0
    %223 = vmatprep.mubr.f32.mxu0 0.0
    %224 = vmatmul.mubr.f32.gmra.mrb[0].mxu0 %v111
    %v225 = vpop.f32.mrb[0].mxu0
    %v226 = vadd.f32 0.0, %v225
    %v227 = vpop.f32.mrb[0].mxu0
    %228 = vmatprep.mubr.f32.mxu0 0.0
    %229 = vmatmul.mubr.f32.gmra.mrb[0].mxu0 %v112
    %v230 = vpop.f32.mrb[0].mxu0
    %v231 = vadd.f32 0.0, %v230
    %v232 = vpop.f32.mrb[0].mxu0
    %233 = vmatprep.mubr.f32.mxu0 0.0
    %234 = vmatmul.mubr.f32.gmra.mrb[0].mxu0 %v113
    %v235 = vpop.f32.mrb[0].mxu0
    %v236 = vadd.f32 0.0, %v235
    %v237 = vpop.f32.mrb[0].mxu0
    %238 = vmatprep.mubr.f32.mxu0 0.0
    %239 = vmatmul.mubr.f32.gmra.mrb[0].mxu0 %v114
    %v240 = vpop.f32.mrb[0].mxu0
    %v241 = vadd.f32 0.0, %v240
    %v242 = vpop.f32.mrb[0].mxu0
    %243 = vmatprep.mubr.f32.mxu0 0.0
    %244 = vmatmul.mubr.f32.gmra.mrb[0].mxu0 %v115
    %v245 = vpop.f32.mrb[0].mxu0
    %v246 = vadd.f32 0.0, %v245
    %v247 = vpop.f32.mrb[0].mxu0
    %248 = vmatprep.mubr.f32.mxu0 0.0
    %249 = vmatmul.mubr.f32.gmra.mrb[0].mxu0 %v116
    %v250 = vpop.f32.mrb[0].mxu0
    %v251 = vadd.f32 0.0, %v250
    %v252 = vpop.f32.mrb[0].mxu0
    %253 = vmatprep.mubr.f32.mxu0 0.0
    %254 = vmatmul.mubr.f32.gmra.mrb[0].mxu0 %v117
    %v255 = vpop.f32.mrb[0].mxu0
    %v256 = vadd.f32 0.0, %v255
    %v257 = vpop.f32.mrb[0].mxu0
    %258 = vmatprep.mubr.f32.mxu0 0.0
    %259 = vmatmul.mubr.f32.gmra.mrb[0].mxu0 %v118
    %v260 = vpop.f32.mrb[0].mxu0
    %v261 = vadd.f32 0.0, %v260
    %v262 = vpop.f32.mrb[0].mxu0
    %263 = vmatprep.mubr.f32.mxu0 0.0
    %264 = vmatmul.mubr.f32.gmra.mrb[0].mxu0 %v119
    %v265 = vpop.f32.mrb[0].mxu0
    %v266 = vadd.f32 0.0, %v265
    %v267 = vpop.f32.mrb[0].mxu0
    %268 = vmatprep.mubr.f32.mxu0 0.0
    %269 = vmatmul.mubr.f32.gmra.mrb[0].mxu0 %v120
    %v270 = vpop.f32.mrb[0].mxu0
    %v271 = vadd.f32 0.0, %v270
    %v272 = vpop.f32.mrb[0].mxu0
    %273 = vmatprep.mubr.f32.mxu0 0.0
    %274 = vmatmul.mubr.f32.gmra.mrb[0].mxu0 %v121
    %v275 = vpop.f32.mrb[0].mxu0
    %v276 = vadd.f32 0.0, %v275
    %v277 = vpop.f32.mrb[0].mxu0
    %278 = vmatprep.mubr.f32.mxu0 0.0
    %279 = vmatmul.mubr.f32.gmra.mrb[0].mxu0 %v122
    %v280 = vpop.f32.mrb[0].mxu0
    %v281 = vadd.f32 0.0, %v280
    %v282 = vpop.f32.mrb[0].mxu0
    %283 = vdwg.mxu0
    %v284 = vadd.f32 %v91, %v206
    %v285 = vadd.f32 %v92, %v211
    %v286 = vadd.f32 %v93, %v216
    %v287 = vadd.f32 %v94, %v221
    %v288 = vadd.f32 %v95, %v226
    %v289 = vadd.f32 %v96, %v231
    %v290 = vadd.f32 %v97, %v236
    %v291 = vadd.f32 %v98, %v241
    %v292 = vadd.f32 %v99, %v246
    %v293 = vadd.f32 %v100, %v251
    %v294 = vadd.f32 %v101, %v256
    %v295 = vadd.f32 %v102, %v261
    %v296 = vadd.f32 %v103, %v266
    %v297 = vadd.f32 %v104, %v271
    %v298 = vadd.f32 %v105, %v276
    %v299 = vadd.f32 %v106, %v281
    %300 = vst [vmem:[#allocation2] sm:$0xff] %v284
    %301 = vst [vmem:[#allocation2 + $0x8] sm:$0xff] %v285
    %302 = vst [vmem:[#allocation2 + $0x10] sm:$0xff] %v286
    %303 = vst [vmem:[#allocation2 + $0x18] sm:$0xff] %v287
    %304 = vst [vmem:[#allocation2 + $0x20] sm:$0xff] %v288
    %305 = vst [vmem:[#allocation2 + $0x28] sm:$0xff] %v289
    %306 = vst [vmem:[#allocation2 + $0x30] sm:$0xff] %v290
    %307 = vst [vmem:[#allocation2 + $0x38] sm:$0xff] %v291
    %308 = vst [vmem:[#allocation2 + $0x40] sm:$0xff] %v292
    %309 = vst [vmem:[#allocation2 + $0x48] sm:$0xff] %v293
    %310 = vst [vmem:[#allocation2 + $0x50] sm:$0xff] %v294
    %311 = vst [vmem:[#allocation2 + $0x58] sm:$0xff] %v295
    %312 = vst [vmem:[#allocation2 + $0x60] sm:$0xff] %v296
    %313 = vst [vmem:[#allocation2 + $0x68] sm:$0xff] %v297
    %314 = vst [vmem:[#allocation2 + $0x70] sm:$0xff] %v298
    %315 = vst [vmem:[#allocation2 + $0x78] sm:$0xff] %v299
    // Predicated region
    $region38: #{tpu_custom_call.1} parent=1 // pred_check
      %p316 = pneg %p71
    $region39: #{tpu_custom_call.1} parent=1 // pred_check_branch
      %318 = sbr.rel (%p316) target = $region41
    $region40: #{tpu_custom_call.1} parent=1 // pred_region
      %v319 = vld [vmem:[#allocation2] sm:$0xff]
      %v320 = vld [vmem:[#allocation2 + $0x8] sm:$0xff]
      %v321 = vld [vmem:[#allocation2 + $0x10] sm:$0xff]
      %v322 = vld [vmem:[#allocation2 + $0x18] sm:$0xff]
      %v323 = vld [vmem:[#allocation2 + $0x20] sm:$0xff]
      %v324 = vld [vmem:[#allocation2 + $0x28] sm:$0xff]
      %v325 = vld [vmem:[#allocation2 + $0x30] sm:$0xff]
      %v326 = vld [vmem:[#allocation2 + $0x38] sm:$0xff]
      %v327 = vld [vmem:[#allocation2 + $0x40] sm:$0xff]
      %v328 = vld [vmem:[#allocation2 + $0x48] sm:$0xff]
      %v329 = vld [vmem:[#allocation2 + $0x50] sm:$0xff]
      %v330 = vld [vmem:[#allocation2 + $0x58] sm:$0xff]
      %v331 = vld [vmem:[#allocation2 + $0x60] sm:$0xff]
      %v332 = vld [vmem:[#allocation2 + $0x68] sm:$0xff]
      %v333 = vld [vmem:[#allocation2 + $0x70] sm:$0xff]
      %v334 = vld [vmem:[#allocation2 + $0x78] sm:$0xff]
      %v335 = vld [vmem:[#allocation8] sm:$0x1]
      %v337 = vlaneseq
      %v338 = vshrl.u32 %v337, 7
      %v339 = vsub.s32 0, %v338
      %v340 = vrot.slane %v335, %v339
      %v342 = vadd.f32 %v319, %v340
      %v343 = vadd.f32 %v320, %v340
      %v344 = vadd.f32 %v321, %v340
      %v345 = vadd.f32 %v322, %v340
      %v346 = vadd.f32 %v323, %v340
      %v347 = vadd.f32 %v324, %v340
      %v348 = vadd.f32 %v325, %v340
      %v349 = vadd.f32 %v326, %v340
      %v350 = vadd.f32 %v327, %v340
      %v351 = vadd.f32 %v328, %v340
      %v352 = vadd.f32 %v329, %v340
      %v353 = vadd.f32 %v330, %v340
      %v354 = vadd.f32 %v331, %v340
      %v355 = vadd.f32 %v332, %v340
      %v356 = vadd.f32 %v333, %v340
      %v357 = vadd.f32 %v334, %v340
      %v358 = vmax.f32 %v342, 0.0
      %v359 = vmax.f32 %v343, 0.0
      %v360 = vmax.f32 %v344, 0.0
      %v361 = vmax.f32 %v345, 0.0
      %v362 = vmax.f32 %v346, 0.0
      %v363 = vmax.f32 %v347, 0.0
      %v364 = vmax.f32 %v348, 0.0
      %v365 = vmax.f32 %v349, 0.0
      %v366 = vmax.f32 %v350, 0.0
      %v367 = vmax.f32 %v351, 0.0
      %v368 = vmax.f32 %v352, 0.0
      %v369 = vmax.f32 %v353, 0.0
      %v370 = vmax.f32 %v354, 0.0
      %v371 = vmax.f32 %v355, 0.0
      %v372 = vmax.f32 %v356, 0.0
      %v373 = vmax.f32 %v357, 0.0
      %v374 = vld [vmem:[#allocation9] sm:$0xff]
      %v375 = vld [vmem:[#allocation9 + $0x8] sm:$0xff]
      %v376 = vld [vmem:[#allocation9 + $0x10] sm:$0xff]
      %v377 = vld [vmem:[#allocation9 + $0x18] sm:$0xff]
      %v378 = vld [vmem:[#allocation9 + $0x20] sm:$0xff]
      %v379 = vld [vmem:[#allocation9 + $0x28] sm:$0xff]
      %v380 = vld [vmem:[#allocation9 + $0x30] sm:$0xff]
      %v381 = vld [vmem:[#allocation9 + $0x38] sm:$0xff]
      %v382 = vld [vmem:[#allocation9 + $0x40] sm:$0xff]
      %v383 = vld [vmem:[#allocation9 + $0x48] sm:$0xff]
      %v384 = vld [vmem:[#allocation9 + $0x50] sm:$0xff]
      %v385 = vld [vmem:[#allocation9 + $0x58] sm:$0xff]
      %v386 = vld [vmem:[#allocation9 + $0x60] sm:$0xff]
      %v387 = vld [vmem:[#allocation9 + $0x68] sm:$0xff]
      %v388 = vld [vmem:[#allocation9 + $0x70] sm:$0xff]
      %v389 = vld [vmem:[#allocation9 + $0x78] sm:$0xff]
      %390 = vmatprep.subr.mxu0 0.0
      %391 = vmatpush1.msra.mxu0 %v374
      %392 = vmatprep.subr.mxu0 0.0
      %393 = vmatpush1.msra.mxu0 %v375
      %394 = vmatprep.subr.mxu0 0.0
      %395 = vmatpush1.msra.mxu0 %v376
      %396 = vmatprep.subr.mxu0 0.0
      %397 = vmatpush1.msra.mxu0 %v377
      %398 = vmatprep.subr.mxu0 0.0
      %399 = vmatpush1.msra.mxu0 %v378
      %400 = vmatprep.subr.mxu0 0.0
      %401 = vmatpush1.msra.mxu0 %v379
      %402 = vmatprep.subr.mxu0 0.0
      %403 = vmatpush1.msra.mxu0 %v380
      %404 = vmatprep.subr.mxu0 0.0
      %405 = vmatpush1.msra.mxu0 %v381
      %406 = vmatprep.subr.mxu0 0.0
      %407 = vmatpush1.msra.mxu0 %v382
      %408 = vmatprep.subr.mxu0 0.0
      %409 = vmatpush1.msra.mxu0 %v383
      %410 = vmatprep.subr.mxu0 0.0
      %411 = vmatpush1.msra.mxu0 %v384
      %412 = vmatprep.subr.mxu0 0.0
      %413 = vmatpush1.msra.mxu0 %v385
      %414 = vmatprep.subr.mxu0 0.0
      %415 = vmatpush1.msra.mxu0 %v386
      %416 = vmatprep.subr.mxu0 0.0
      %417 = vmatpush1.msra.mxu0 %v387
      %418 = vmatprep.subr.mxu0 0.0
      %419 = vmatpush1.msra.mxu0 %v388
      %420 = vmatprep.subr.mxu0 0.0
      %421 = vmatpush1.msra.mxu0 %v389
      %422 = vmatprep.subr.mxu0 0.0
      %423 = vmatpush1.msra.mxu0 0.0
      %424 = vmatprep.subr.mxu0 0.0
      %425 = vmatpush1.msra.mxu0 0.0
      %426 = vmatprep.subr.mxu0 0.0
      %427 = vmatpush1.msra.mxu0 0.0
      %428 = vmatprep.subr.mxu0 0.0
      %429 = vmatpush1.msra.mxu0 0.0
      %430 = vmatprep.subr.mxu0 0.0
      %431 = vmatpush1.msra.mxu0 0.0
      %432 = vmatprep.subr.mxu0 0.0
      %433 = vmatpush1.msra.mxu0 0.0
      %434 = vmatprep.subr.mxu0 0.0
      %435 = vmatpush1.msra.mxu0 0.0
      %436 = vmatprep.subr.mxu0 0.0
      %437 = vmatpush1.msra.mxu0 0.0
      %438 = vmatprep.subr.mxu0 0.0
      %439 = vmatpush1.msra.mxu0 0.0
      %440 = vmatprep.subr.mxu0 0.0
      %441 = vmatpush1.msra.mxu0 0.0
      %442 = vmatprep.subr.mxu0 0.0
      %443 = vmatpush1.msra.mxu0 0.0
      %444 = vmatprep.subr.mxu0 0.0
      %445 = vmatpush1.msra.mxu0 0.0
      %446 = vmatprep.subr.mxu0 0.0
      %447 = vmatpush1.msra.mxu0 0.0
      %448 = vmatprep.subr.mxu0 0.0
      %449 = vmatpush1.msra.mxu0 0.0
      %450 = vmatprep.subr.mxu0 0.0
      %451 = vmatpush1.msra.mxu0 0.0
      %452 = vmatprep.subr.mxu0 0.0
      %453 = vmatpush1.msra.mxu0 0.0
      %454 = vmatprep.mubr.f32.mxu0 0.0
      %455 = vmatmul.mubr.f32.gmra.mrb[0].mxu0 %v358
      %v456 = vpop.f32.mrb[0].mxu0
      %v457 = vadd.f32 0.0, %v456
      %v458 = vpop.f32.mrb[0].mxu0
      %459 = vmatprep.mubr.f32.mxu0 0.0
      %460 = vmatmul.mubr.f32.gmra.mrb[0].mxu0 %v359
      %v461 = vpop.f32.mrb[0].mxu0
      %v462 = vadd.f32 0.0, %v461
      %v463 = vpop.f32.mrb[0].mxu0
      %464 = vmatprep.mubr.f32.mxu0 0.0
      %465 = vmatmul.mubr.f32.gmra.mrb[0].mxu0 %v360
      %v466 = vpop.f32.mrb[0].mxu0
      %v467 = vadd.f32 0.0, %v466
      %v468 = vpop.f32.mrb[0].mxu0
      %469 = vmatprep.mubr.f32.mxu0 0.0
      %470 = vmatmul.mubr.f32.gmra.mrb[0].mxu0 %v361
      %v471 = vpop.f32.mrb[0].mxu0
      %v472 = vadd.f32 0.0, %v471
      %v473 = vpop.f32.mrb[0].mxu0
      %474 = vmatprep.mubr.f32.mxu0 0.0
      %475 = vmatmul.mubr.f32.gmra.mrb[0].mxu0 %v362
      %v476 = vpop.f32.mrb[0].mxu0
      %v477 = vadd.f32 0.0, %v476
      %v478 = vpop.f32.mrb[0].mxu0
      %479 = vmatprep.mubr.f32.mxu0 0.0
      %480 = vmatmul.mubr.f32.gmra.mrb[0].mxu0 %v363
      %v481 = vpop.f32.mrb[0].mxu0
      %v482 = vadd.f32 0.0, %v481
      %v483 = vpop.f32.mrb[0].mxu0
      %484 = vmatprep.mubr.f32.mxu0 0.0
      %485 = vmatmul.mubr.f32.gmra.mrb[0].mxu0 %v364
      %v486 = vpop.f32.mrb[0].mxu0
      %v487 = vadd.f32 0.0, %v486
      %v488 = vpop.f32.mrb[0].mxu0
      %489 = vmatprep.mubr.f32.mxu0 0.0
      %490 = vmatmul.mubr.f32.gmra.mrb[0].mxu0 %v365
      %v491 = vpop.f32.mrb[0].mxu0
      %v492 = vadd.f32 0.0, %v491
      %v493 = vpop.f32.mrb[0].mxu0
      %494 = vmatprep.mubr.f32.mxu0 0.0
      %495 = vmatmul.mubr.f32.gmra.mrb[0].mxu0 %v366
      %v496 = vpop.f32.mrb[0].mxu0
      %v497 = vadd.f32 0.0, %v496
      %v498 = vpop.f32.mrb[0].mxu0
      %499 = vmatprep.mubr.f32.mxu0 0.0
      %500 = vmatmul.mubr.f32.gmra.mrb[0].mxu0 %v367
      %v501 = vpop.f32.mrb[0].mxu0
      %v502 = vadd.f32 0.0, %v501
      %v503 = vpop.f32.mrb[0].mxu0
      %504 = vmatprep.mubr.f32.mxu0 0.0
      %505 = vmatmul.mubr.f32.gmra.mrb[0].mxu0 %v368
      %v506 = vpop.f32.mrb[0].mxu0
      %v507 = vadd.f32 0.0, %v506
      %v508 = vpop.f32.mrb[0].mxu0
      %509 = vmatprep.mubr.f32.mxu0 0.0
      %510 = vmatmul.mubr.f32.gmra.mrb[0].mxu0 %v369
      %v511 = vpop.f32.mrb[0].mxu0
      %v512 = vadd.f32 0.0, %v511
      %v513 = vpop.f32.mrb[0].mxu0
      %514 = vmatprep.mubr.f32.mxu0 0.0
      %515 = vmatmul.mubr.f32.gmra.mrb[0].mxu0 %v370
      %v516 = vpop.f32.mrb[0].mxu0
      %v517 = vadd.f32 0.0, %v516
      %v518 = vpop.f32.mrb[0].mxu0
      %519 = vmatprep.mubr.f32.mxu0 0.0
      %520 = vmatmul.mubr.f32.gmra.mrb[0].mxu0 %v371
      %v521 = vpop.f32.mrb[0].mxu0
      %v522 = vadd.f32 0.0, %v521
      %v523 = vpop.f32.mrb[0].mxu0
      %524 = vmatprep.mubr.f32.mxu0 0.0
      %525 = vmatmul.mubr.f32.gmra.mrb[0].mxu0 %v372
      %v526 = vpop.f32.mrb[0].mxu0
      %v527 = vadd.f32 0.0, %v526
      %v528 = vpop.f32.mrb[0].mxu0
      %529 = vmatprep.mubr.f32.mxu0 0.0
      %530 = vmatmul.mubr.f32.gmra.mrb[0].mxu0 %v373
      %v531 = vpop.f32.mrb[0].mxu0
      %v532 = vadd.f32 0.0, %v531
      %v533 = vpop.f32.mrb[0].mxu0
      %534 = vdwg.mxu0
      %535 = vst [vmem:[#allocation11] sm:$0xff] %v457
      %536 = vst [vmem:[#allocation11 + $0x8] sm:$0xff] %v462
      %537 = vst [vmem:[#allocation11 + $0x10] sm:$0xff] %v467
      %538 = vst [vmem:[#allocation11 + $0x18] sm:$0xff] %v472
      %539 = vst [vmem:[#allocation11 + $0x20] sm:$0xff] %v477
      %540 = vst [vmem:[#allocation11 + $0x28] sm:$0xff] %v482
      %541 = vst [vmem:[#allocation11 + $0x30] sm:$0xff] %v487
      %542 = vst [vmem:[#allocation11 + $0x38] sm:$0xff] %v492
      %543 = vst [vmem:[#allocation11 + $0x40] sm:$0xff] %v497
      %544 = vst [vmem:[#allocation11 + $0x48] sm:$0xff] %v502
      %545 = vst [vmem:[#allocation11 + $0x50] sm:$0xff] %v507
      %546 = vst [vmem:[#allocation11 + $0x58] sm:$0xff] %v512
      %547 = vst [vmem:[#allocation11 + $0x60] sm:$0xff] %v517
      %548 = vst [vmem:[#allocation11 + $0x68] sm:$0xff] %v522
      %549 = vst [vmem:[#allocation11 + $0x70] sm:$0xff] %v527
      %550 = vst [vmem:[#allocation11 + $0x78] sm:$0xff] %v532
    $region41: #{tpu_custom_call.1} parent=1 // pred_fallthru
      _
    // Predicated region
    $region42: #{tpu_custom_call.1} parent=1 // pred_check
      _
    $region43: #{tpu_custom_call.1} parent=1 // pred_check_branch
      %552 = sbr.rel (0) target = $region45
    $region44: #{tpu_custom_call.1} parent=1 // pred_region
      %s554 = ssub.s32 2048, 2048
      %555 = vsyncadd [#allocation5], %s554
      %s556 = sshll.u32 [#allocation11], 4
      %s557 = int_to_ptr.vmem [resolvable:$true] %s556
      %562 = dma.vmem_to_hbm [thread:$0]  %s557, 2048, %s4, [#allocation5], 128, 128, 8
    $region45: #{tpu_custom_call.1} parent=1 // pred_fallthru
      _
    // Predicated region
    $region46: #{tpu_custom_call.1} parent=1 // pred_check
      _
    $region47: #{tpu_custom_call.1} parent=1 // pred_check_branch
      %564 = sbr.rel (0) target = $region49
    $region48: #{tpu_custom_call.1} parent=1 // pred_region
      %565 = dma.done [#allocation5], 2048
    $region49: #{tpu_custom_call.1} parent=1 // pred_fallthru
      _
    %566 = vsyncpa [#allocation4], 1
    %567 = vsyncpa [#allocation7], 1
    %568 = vsyncpa [#allocation10], 1
    %569 = vsyncpa [#allocation5], 1

</llo_original>
